<compile_context>
chip_gen: v5e
topology: v5e:2x2
jax: 0.10.0
libtpu: 0.0.40
codegen_flags: <defaults>
</compile_context>

<pallas_src>
import functools

import jax
import jax.numpy as jnp
from jax.experimental import pallas as pl
from jax.experimental.pallas import tpu as pltpu

LANES = 128
_MAX_CHUNK_ROWS = 512          # rows per inner fori_loop step (f32 temps ~256 KiB)


def _sublane_multiple(dtype) -> int:
    # 8 sublanes for 32-bit, 16 for 16-bit, 32 for 8-bit dtypes.
    return max(8, 32 // jnp.dtype(dtype).itemsize)


def _num_tensorcores() -> int:
    # v5e / v6e have one TensorCore per chip; v7x has two.  Only split on v7x.
    try:
        kind = jax.devices()[0].device_kind.lower()
    except Exception:
        return 1
    return 2 if ("v7" in kind or "7x" in kind) else 1


def _make_kernel(br, chunk, nb, m_rows):
    nchunks = br // chunk
    unroll = min(4, nchunks)

    def kernel(x_ref, t_ref, inter_ref, den_ref):
        i = pl.program_id(1)

        @pl.when(i == 0)
        def _init():
            inter_ref[...] = jnp.zeros_like(inter_ref)
            den_ref[...] = jnp.zeros_like(den_ref)

        # Global row index of this block's first row; rows >= m_rows (ragged
        # edge or phantom per-core blocks) are masked to zero below.
        row0 = (pl.program_id(0) * nb + i) * br
        row_iota = jax.lax.broadcasted_iota(jnp.int32, (chunk, LANES), 0)

        def body(j, carry):
            acc_i, acc_d = carry
            r = pl.multiple_of(j * chunk, chunk)
            xb = x_ref[pl.ds(r, chunk), :].astype(jnp.float32)
            tb = t_ref[pl.ds(r, chunk), :].astype(jnp.float32)
            # sigmoid(x) = 0.5 * (tanh(x/2) + 1): one EUP push per vreg.
            s = 0.5 * jnp.tanh(0.5 * xb) + 0.5
            valid = (row0 + r + row_iota) < m_rows
            s = jnp.where(valid, s, 0.0)
            tb = jnp.where(valid, tb, 0.0)
            # Group rows in sets of 8 sublanes: leading-axis sums are pure
            # VPU adds into (8,128) vreg accumulators.
            s3 = s.reshape(chunk // 8, 8, LANES)
            t3 = tb.reshape(chunk // 8, 8, LANES)
            return (acc_i + jnp.sum(s3 * t3, axis=0),
                    acc_d + jnp.sum(s3 + t3, axis=0))

        zero = jnp.zeros((8, LANES), jnp.float32)
        acc_i, acc_d = jax.lax.fori_loop(0, nchunks, body, (zero, zero),
                                         unroll=unroll)
        inter_ref[0] += acc_i
        den_ref[0] += acc_d

    return kernel


@functools.partial(jax.jit, static_argnames=("block_bytes",))
def custom_dice_loss(inputs, targets, smooth=1.0, *, block_bytes=4 * 1024 * 1024):
    x = jnp.reshape(inputs, (-1,))
    t = jnp.reshape(targets, (-1,))
    n = x.shape[0]

    m = n // LANES                      # full 128-lane rows for the kernel
    rem = n - m * LANES                 # <128-element tail -> JAX epilogue

    x_item = jnp.dtype(x.dtype).itemsize
    t_item = jnp.dtype(t.dtype).itemsize
    mult = max(_sublane_multiple(x.dtype), _sublane_multiple(t.dtype))

    if m < mult:
        # Too small for even one tile: do everything in plain JAX.
        s = jax.nn.sigmoid(x.astype(jnp.float32))
        tf = t.astype(jnp.float32)
        inter = jnp.sum(s * tf)
        den = jnp.sum(s) + jnp.sum(tf)
        dice = (2.0 * inter + smooth) / (den + smooth)
        return (1.0 - dice).astype(jnp.float32)

    # Inner chunk rows: multiple of the dtype sublane packing, <= m.
    chunk = max(mult, min(_MAX_CHUNK_ROWS, (m // mult) * mult))
    # Block rows: multiple of `chunk`, ~block_bytes per input per step, and
    # <= m so no block starts past the array (only the last one is ragged).
    itemsize = max(x_item, t_item)
    br_cap = max(chunk, (block_bytes // (LANES * itemsize)) // chunk * chunk)
    br = max(chunk, min(br_cap, (m // chunk) * chunk))

    total_blocks = -(-m // br)
    cores = _num_tensorcores()
    if total_blocks < cores:
        cores = 1
    nb = -(-total_blocks // cores)      # row blocks per core

    # No jnp.pad: pure reshape when aligned, prefix slice otherwise.
    x2 = (x if rem == 0 else x[: m * LANES]).reshape(m, LANES)
    t2 = (t if rem == 0 else t[: m * LANES]).reshape(m, LANES)

    in_spec = pl.BlockSpec(
        (br, LANES),
        # Clamp phantom per-core blocks (cores * nb may exceed total_blocks)
        # onto the last valid block; the kernel masks their rows to zero.
        lambda c, i: (jnp.minimum(c * nb + i, total_blocks - 1), 0))
    out_spec = pl.BlockSpec((1, 8, LANES), lambda c, i: (c, 0, 0))
    part = jax.ShapeDtypeStruct((cores, 8, LANES), jnp.float32)

    dims = ((pltpu.CORE_PARALLEL, pltpu.ARBITRARY) if cores > 1
            else ("arbitrary", "arbitrary"))
    vmem_limit = int(2 * br * LANES * (x_item + t_item)   # double-buffered inputs
                     + 8 * chunk * LANES * 4              # in-flight f32 temps
                     + 4 * cores * 8 * LANES * 4          # resident partials
                     + (2 << 20))                         # headroom
    vmem_limit = min(max(vmem_limit, 4 << 20), 100 << 20)

    p_inter, p_den = pl.pallas_call(
        _make_kernel(br, chunk, nb, m),
        out_shape=(part, part),
        grid=(cores, nb),
        in_specs=[in_spec, in_spec],
        out_specs=(out_spec, out_spec),
        compiler_params=pltpu.CompilerParams(
            dimension_semantics=dims,
            vmem_limit_bytes=vmem_limit),
    )(x2, t2)

    # Tiny epilogue in plain JAX: cross-lane reduce + <128-element tail.
    inter = jnp.sum(p_inter)
    den = jnp.sum(p_den)
    if rem:
        xt = jax.nn.sigmoid(x[m * LANES:].astype(jnp.float32))
        tt = t[m * LANES:].astype(jnp.float32)
        inter = inter + jnp.sum(xt * tt)
        den = den + jnp.sum(xt) + jnp.sum(tt)

    dice = (2.0 * inter + smooth) / (den + smooth)
    return (1.0 - dice).astype(jnp.float32)


def _reference(inputs, targets, smooth=1.0):
    s = jax.nn.sigmoid(inputs.astype(jnp.float32)).reshape(-1)
    t = targets.astype(jnp.float32).reshape(-1)
    inter = jnp.sum(s * t)
    dice = (2.0 * inter + smooth) / (jnp.sum(s) + jnp.sum(t) + smooth)
    return 1.0 - dice


if __name__ == "__main__":
    key = jax.random.PRNGKey(0)
    k1, k2, k3, k4 = jax.random.split(key, 4)

    # Case 1: tile-aligned f32 logits / binary targets, NCHW-like (2,4,16,16).
    x1 = jax.random.normal(k1, (2, 4, 16, 16), dtype=jnp.float32)
    t1 = (jax.random.uniform(k2, (2, 4, 16, 16)) > 0.5).astype(jnp.float32)
    loss1 = jax.block_until_ready(custom_dice_loss(x1, t1))
    ref1 = _reference(x1, t1)
    assert jnp.allclose(loss1, ref1, atol=1e-5, rtol=1e-5), (loss1, ref1)

    # Case 2: non-128-aligned size -> ragged block mask + tail epilogue.
    x2 = jax.random.normal(k3, (2, 3, 15, 15), dtype=jnp.float32)
    t2 = (jax.random.uniform(k4, (2, 3, 15, 15)) > 0.5).astype(jnp.float32)
    loss2 = jax.block_until_ready(custom_dice_loss(x2, t2))
    ref2 = _reference(x2, t2)
    assert jnp.allclose(loss2, ref2, atol=1e-5, rtol=1e-5), (loss2, ref2)

    # Case 3: bf16 data streamed straight into the kernel (bandwidth path).
    x3 = x1.astype(jnp.bfloat16)
    t3 = t1.astype(jnp.bfloat16)
    loss3 = jax.block_until_ready(custom_dice_loss(x3, t3))
    ref3 = _reference(x3, t3)
    assert jnp.allclose(loss3, ref3, atol=1e-4, rtol=1e-4), (loss3, ref3)

    print("KERNEL_OK")
</pallas_src>

<mosaic_0001>
module attributes {stable_mosaic.version = 11 : i64} {
  func.func @kernel(%arg0: i32, %arg1: i32, %arg2: memref<16x128xf32, #tpu.memory_space<vmem>>, %arg3: memref<16x128xf32, #tpu.memory_space<vmem>>, %arg4: memref<1x8x128xf32, #tpu.memory_space<vmem>>, %arg5: memref<1x8x128xf32, #tpu.memory_space<vmem>>) attributes {dimension_semantics = [#tpu.dimension_semantics<arbitrary>, #tpu.dimension_semantics<arbitrary>], iteration_bounds = array<i64: 1, 1>, scalar_prefetch = 0 : i64, scratch_operands = 0 : i64, tpu.core_type = #tpu.core_type<tc>, window_params = [{transform_indices = @transform_0, window_bounds = array<i64: 16, 128>}, {transform_indices = @transform_1, window_bounds = array<i64: 16, 128>}, {transform_indices = @transform_2, window_bounds = array<i64: 1, 8, 128>}, {transform_indices = @transform_3, window_bounds = array<i64: 1, 8, 128>}]} {
    %c0_i32 = arith.constant 0 : i32
    %0 = arith.cmpi eq, %arg1, %c0_i32 : i32
    %1 = arith.extui %0 : i1 to i32
    %c0_i32_0 = arith.constant 0 : i32
    %2 = arith.cmpi ne, %1, %c0_i32_0 : i32
    scf.if %2 {
      %cst_25 = arith.constant 0.000000e+00 : f32
      %50 = vector.broadcast %cst_25 : f32 to vector<1x8x128xf32>
      %c0_26 = arith.constant 0 : index
      %c0_27 = arith.constant 0 : index
      %c0_28 = arith.constant 0 : index
      %51 = vector.load %arg4[%c0_26, %c0_27, %c0_28] : memref<1x8x128xf32, #tpu.memory_space<vmem>>, vector<1x8x128xf32>
      tpu.vector_store %arg4[%c0_26, %c0_27, %c0_28], %50 {strides = array<i32>} : memref<1x8x128xf32, #tpu.memory_space<vmem>>, vector<1x8x128xf32>,
      %cst_29 = arith.constant 0.000000e+00 : f32
      %52 = vector.broadcast %cst_29 : f32 to vector<1x8x128xf32>
      %c0_30 = arith.constant 0 : index
      %c0_31 = arith.constant 0 : index
      %c0_32 = arith.constant 0 : index
      %53 = vector.load %arg5[%c0_30, %c0_31, %c0_32] : memref<1x8x128xf32, #tpu.memory_space<vmem>>, vector<1x8x128xf32>
      tpu.vector_store %arg5[%c0_30, %c0_31, %c0_32], %52 {strides = array<i32>} : memref<1x8x128xf32, #tpu.memory_space<vmem>>, vector<1x8x128xf32>,
    } else {
    }
    %c1_i32 = arith.constant 1 : i32
    %3 = arith.muli %arg0, %c1_i32 : i32
    %4 = arith.addi %3, %arg1 : i32
    %c16_i32 = arith.constant 16 : i32
    %5 = arith.muli %4, %c16_i32 : i32
    %6 = tpu.iota {dimensions = array<i32: 0>} : vector<16x128xi32>
    %cst = arith.constant 0.000000e+00 : f32
    %7 = vector.broadcast %cst : f32 to vector<8x128xf32>
    %c0_i32_1 = arith.constant 0 : i32
    %c16_i32_2 = arith.constant 16 : i32
    %8 = arith.muli %c0_i32_1, %c16_i32_2 : i32
    %9 = tpu.assume_multiple %8, 16 : i32
    %10 = arith.index_cast %9 : i32 to index
    %c0 = arith.constant 0 : index
    %11 = vector.load %arg2[%10, %c0] : memref<16x128xf32, #tpu.memory_space<vmem>>, vector<16x128xf32>
    %12 = arith.index_cast %9 : i32 to index
    %c0_3 = arith.constant 0 : index
    %13 = vector.load %arg3[%12, %c0_3] : memref<16x128xf32, #tpu.memory_space<vmem>>, vector<16x128xf32>
    %cst_4 = arith.constant 5.000000e-01 : f32
    %14 = vector.broadcast %cst_4 : f32 to vector<16x128xf32>
    %15 = arith.mulf %14, %11 : vector<16x128xf32>
    %16 = math.tanh %15 : vector<16x128xf32>
    %cst_5 = arith.constant 5.000000e-01 : f32
    %17 = vector.broadcast %cst_5 : f32 to vector<16x128xf32>
    %18 = arith.mulf %17, %16 : vector<16x128xf32>
    %cst_6 = arith.constant 5.000000e-01 : f32
    %19 = vector.broadcast %cst_6 : f32 to vector<16x128xf32>
    %20 = arith.addf %18, %19 : vector<16x128xf32>
    %21 = arith.addi %5, %9 : i32
    %22 = vector.broadcast %21 : i32 to vector<16x128xi32>
    %23 = arith.addi %22, %6 : vector<16x128xi32>
    %c16_i32_7 = arith.constant 16 : i32
    %24 = vector.broadcast %c16_i32_7 : i32 to vector<16x128xi32>
    %25 = arith.cmpi slt, %23, %24 : vector<16x128xi32>
    %cst_8 = arith.constant 0.000000e+00 : f32
    %26 = vector.broadcast %cst_8 : f32 to vector<16x128xf32>
    %27 = arith.select %25, %20, %26 : vector<16x128xi1>, vector<16x128xf32>
    %cst_9 = arith.constant 0.000000e+00 : f32
    %28 = vector.broadcast %cst_9 : f32 to vector<16x128xf32>
    %29 = arith.select %25, %13, %28 : vector<16x128xi1>, vector<16x128xf32>
    %30 = vector.shape_cast %27 : vector<16x128xf32> to vector<2x8x128xf32>
    %31 = vector.shape_cast %29 : vector<16x128xf32> to vector<2x8x128xf32>
    %32 = arith.mulf %30, %31 : vector<2x8x128xf32>
    %cst_10 = arith.constant dense<0.000000e+00> : vector<8x128xf32>
    %33 = vector.multi_reduction <add>, %32, %cst_10 [0] : vector<2x8x128xf32> to vector<8x128xf32>
    %34 = arith.addf %7, %33 : vector<8x128xf32>
    %35 = arith.addf %30, %31 : vector<2x8x128xf32>
    %cst_11 = arith.constant dense<0.000000e+00> : vector<8x128xf32>
    %36 = vector.multi_reduction <add>, %35, %cst_11 [0] : vector<2x8x128xf32> to vector<8x128xf32>
    %37 = arith.addf %7, %36 : vector<8x128xf32>
    %c1_i32_12 = arith.constant 1 : i32
    %c0_13 = arith.constant 0 : index
    %c0_14 = arith.constant 0 : index
    %c0_15 = arith.constant 0 : index
    %38 = vector.load %arg4[%c0_13, %c0_14, %c0_15] : memref<1x8x128xf32, #tpu.memory_space<vmem>>, vector<1x8x128xf32>
    %39 = vector.shape_cast %38 : vector<1x8x128xf32> to vector<8x128xf32>
    %40 = arith.addf %39, %34 : vector<8x128xf32>
    %c0_16 = arith.constant 0 : index
    %c0_17 = arith.constant 0 : index
    %c0_18 = arith.constant 0 : index
    %41 = vector.load %arg4[%c0_16, %c0_17, %c0_18] : memref<1x8x128xf32, #tpu.memory_space<vmem>>, vector<1x8x128xf32>
    %42 = vector.shape_cast %41 : vector<1x8x128xf32> to vector<8x128xf32>
    %43 = vector.shape_cast %40 : vector<8x128xf32> to vector<1x8x128xf32>
    tpu.vector_store %arg4[%c0_16, %c0_17, %c0_18], %43 {strides = array<i32>} : memref<1x8x128xf32, #tpu.memory_space<vmem>>, vector<1x8x128xf32>,
    %c0_19 = arith.constant 0 : index
    %c0_20 = arith.constant 0 : index
    %c0_21 = arith.constant 0 : index
    %44 = vector.load %arg5[%c0_19, %c0_20, %c0_21] : memref<1x8x128xf32, #tpu.memory_space<vmem>>, vector<1x8x128xf32>
    %45 = vector.shape_cast %44 : vector<1x8x128xf32> to vector<8x128xf32>
    %46 = arith.addf %45, %37 : vector<8x128xf32>
    %c0_22 = arith.constant 0 : index
    %c0_23 = arith.constant 0 : index
    %c0_24 = arith.constant 0 : index
    %47 = vector.load %arg5[%c0_22, %c0_23, %c0_24] : memref<1x8x128xf32, #tpu.memory_space<vmem>>, vector<1x8x128xf32>
    %48 = vector.shape_cast %47 : vector<1x8x128xf32> to vector<8x128xf32>
    %49 = vector.shape_cast %46 : vector<8x128xf32> to vector<1x8x128xf32>
    tpu.vector_store %arg5[%c0_22, %c0_23, %c0_24], %49 {strides = array<i32>} : memref<1x8x128xf32, #tpu.memory_space<vmem>>, vector<1x8x128xf32>,
    return
  }
  func.func @transform_0(%arg0: i32, %arg1: i32) -> (i32, i32) {
    %c1_i32 = arith.constant 1 : i32
    %0 = arith.muli %arg0, %c1_i32 : i32
    %1 = arith.addi %0, %arg1 : i32
    %c0_i32 = arith.constant 0 : i32
    %2 = arith.minsi %1, %c0_i32 : i32
    %c0_i32_0 = arith.constant 0 : i32
    %c0_i32_1 = arith.constant 0 : i32
    return %2, %c0_i32_0 : i32, i32
  }
  func.func @transform_1(%arg0: i32, %arg1: i32) -> (i32, i32) {
    %c1_i32 = arith.constant 1 : i32
    %0 = arith.muli %arg0, %c1_i32 : i32
    %1 = arith.addi %0, %arg1 : i32
    %c0_i32 = arith.constant 0 : i32
    %2 = arith.minsi %1, %c0_i32 : i32
    %c0_i32_0 = arith.constant 0 : i32
    %c0_i32_1 = arith.constant 0 : i32
    return %2, %c0_i32_0 : i32, i32
  }
  func.func @transform_2(%arg0: i32, %arg1: i32) -> (i32, i32, i32) {
    %c0_i32 = arith.constant 0 : i32
    %c0_i32_0 = arith.constant 0 : i32
    %c0_i32_1 = arith.constant 0 : i32
    return %arg0, %c0_i32, %c0_i32_0 : i32, i32, i32
  }
  func.func @transform_3(%arg0: i32, %arg1: i32) -> (i32, i32, i32) {
    %c0_i32 = arith.constant 0 : i32
    %c0_i32_0 = arith.constant 0 : i32
    %c0_i32_1 = arith.constant 0 : i32
    return %arg0, %c0_i32, %c0_i32_0 : i32, i32, i32
  }
}

</mosaic_0001>

<llo_original>
// kernel: custom_dice_loss.1
$region0: #{custom_dice_loss.1}
  #allocation0 [shape = 'u32[]', space=smem, size = 0x4, offset = 0x4, fixed_abs, tag = 'smem constant byte address 0x4 - core index']
  #allocation1 [shape = 'u32[72,128]{1,0:T(1,128)}', space=vmem, size = 0x9000, scoped, tag = 'internal scratch']
  %s0 = inlined_call_operand.vmem [shape: f32[16,128], index: 0, kind: input, shape index: {}]
  %s1 = inlined_call_operand.vmem [shape: f32[16,128], index: 1, kind: input, shape index: {}]
  %s2 = inlined_call_operand.vmem [shape: f32[1,8,128], index: 2, kind: output, shape index: {0}]
  %s3 = inlined_call_operand.vmem [shape: f32[1,8,128], index: 3, kind: output, shape index: {1}]
  %4 = xla_tuple %s2, %s3
  %s5 = sld [smem:[#allocation0]]
  $region30: #{custom_dice_loss.1} parent=0
    _
  %s7 = ssub.s32 1, %s5
  %s8 = scalar_select 0, %s7, %s5
  // Predicated region
  $region2: #{custom_dice_loss.1} parent=0 // pred_check
    _
  $region3: #{custom_dice_loss.1} parent=0 // pred_check_branch
    %10 = sbr.rel (0) target = $region5
  $region4: #{custom_dice_loss.1} parent=0 // pred_region
    %s11 = sadd.s32 0, 0
    %p12 = scmp.lt.s32.totalorder %s11, 0
    %s13 = scalar_select %p12, %s11, 0
    %s14 = smul.u32 2, %s13
    %p15 = scmp.lt.s32.totalorder %s14, 1
    %s16 = scalar_select %p15, %s14, 1
    %s17 = smul.addr %s16, 8
    %s18 = scalar_lea.vmem %s0, %s17
    %s19 = sadd.s32 0, 0
    %p20 = scmp.lt.s32.totalorder %s19, 0
    %s21 = scalar_select %p20, %s19, 0
    %s22 = smul.u32 2, %s21
  $region5: #{custom_dice_loss.1} parent=0 // pred_fallthru
    _
  // Predicated region
  $region6: #{custom_dice_loss.1} parent=0 // pred_check
    _
  $region7: #{custom_dice_loss.1} parent=0 // pred_check_branch
    %24 = sbr.rel (0) target = $region9
  $region8: #{custom_dice_loss.1} parent=0 // pred_region
    %s25 = sadd.s32 0, 0
    %p26 = scmp.lt.s32.totalorder %s25, 0
    %s27 = scalar_select %p26, %s25, 0
    %s28 = smul.u32 2, %s27
    %p29 = scmp.lt.s32.totalorder %s28, 1
    %s30 = scalar_select %p29, %s28, 1
    %s31 = smul.addr %s30, 8
    %s32 = scalar_lea.vmem %s1, %s31
    %s33 = sadd.s32 0, 0
    %p34 = scmp.lt.s32.totalorder %s33, 0
    %s35 = scalar_select %p34, %s33, 0
    %s36 = smul.u32 2, %s35
  $region9: #{custom_dice_loss.1} parent=0 // pred_fallthru
    _
  %s37 = sadd.s32 0, 0
  %p38 = scmp.lt.s32.totalorder %s37, 0
  %s39 = scalar_select %p38, %s37, 0
  %s40 = smul.u32 2, %s39
  %p41 = scmp.lt.s32.totalorder %s40, 1
  %s42 = scalar_select %p41, %s40, 1
  %s43 = smul.addr %s42, 8
  %s44 = scalar_lea.vmem %s0, %s43
  %s45 = sadd.s32 0, 0
  %p46 = scmp.lt.s32.totalorder %s45, 0
  %s47 = scalar_select %p46, %s45, 0
  %s48 = smul.u32 2, %s47
  %p49 = scmp.lt.s32.totalorder %s48, 1
  %s50 = scalar_select %p49, %s48, 1
  %s51 = smul.addr %s50, 8
  %s52 = scalar_lea.vmem %s1, %s51
  %s53 = sadd.s32 0, 0
  %p54 = scmp.lt.s32.totalorder %s53, 0
  %s55 = scalar_select %p54, %s53, 0
  %s56 = smul.u32 2, %s55
  %p57 = scmp.lt.s32.totalorder %s56, 1
  %s58 = scalar_select %p57, %s56, 1
  %s59 = smul.addr %s58, 8
  %s60 = scalar_lea.vmem %s0, %s59
  %s61 = sadd.s32 0, 0
  %p62 = scmp.lt.s32.totalorder %s61, 0
  %s63 = scalar_select %p62, %s61, 0
  %s64 = smul.u32 2, %s63
  %s65 = sadd.s32 0, 0
  %p66 = scmp.lt.s32.totalorder %s65, 0
  %s67 = scalar_select %p66, %s65, 0
  %s68 = smul.u32 2, %s67
  %p69 = scmp.lt.s32.totalorder %s68, 1
  %s70 = scalar_select %p69, %s68, 1
  %s71 = smul.addr %s70, 8
  %s72 = scalar_lea.vmem %s1, %s71
  %s73 = sadd.s32 0, 0
  %p74 = scmp.lt.s32.totalorder %s73, 0
  %s75 = scalar_select %p74, %s73, 0
  %s76 = smul.u32 2, %s75
  %p77 = scmp.eq.s32.totalorder 0, 0
  // Predicated region
  $region10: #{custom_dice_loss.1} parent=0 // pred_check
    %p78 = pneg %p77
  $region11: #{custom_dice_loss.1} parent=0 // pred_check_branch
    %80 = sbr.rel (%p78) target = $region13
  $region12: #{custom_dice_loss.1} parent=0 // pred_region
    %81 = vst [vmem:[%s2] sm:$0xff] 0.0
    %82 = vst [vmem:[%s3] sm:$0xff] 0.0
  $region13: #{custom_dice_loss.1} parent=0 // pred_fallthru
    _
  %s83 = sadd.s32 0, 0
  %s84 = smul.u32 %s83, 16
  %v85 = vlaneseq
  %v86 = vshrl.u32 %v85, 7
  %v87 = vadd.s32 %v86, 8
  %v88 = vld [vmem:[%s60] sm:$0xff]
  %v89 = vld [vmem:[%s60 + $0x8] sm:$0xff]
  %v90 = vld [vmem:[%s72] sm:$0xff]
  %v91 = vld [vmem:[%s72 + $0x8] sm:$0xff]
  %v92 = vmul.f32 %v88, 0.5
  %v93 = vmul.f32 %v89, 0.5
  %v94 = vtanh.pop %v92
  %v95 = vtanh.pop %v93
  %v96 = vmul.f32 %v94, 0.5
  %v97 = vmul.f32 %v95, 0.5
  %v98 = vadd.f32 %v96, 0.5
  %v99 = vadd.f32 %v97, 0.5
  %s100 = sadd.s32 %s84, 0
  %v101 = vstv %s100
  %v102 = vadd.s32 %v101, %v86
  %v103 = vadd.s32 %v101, %v87
  %vm104 = vcmp.lt.s32.totalorder %v102, 16
  %vm105 = vcmp.lt.s32.totalorder %v103, 16
  %v106 = vsel %vm104, %v98, 0.0
  %v107 = vsel %vm105, %v99, 0.0
  %v108 = vsel %vm104, %v90, 0.0
  %v109 = vsel %vm105, %v91, 0.0
  %v110 = vmul.f32 %v106, %v108
  %v111 = vmul.f32 %v107, %v109
  %v112 = vadd.f32 %v110, %v111
  %v113 = vadd.f32 %v112, 0.0
  %v114 = vadd.f32 %v106, %v108
  %v115 = vadd.f32 %v107, %v109
  %v116 = vadd.f32 %v114, %v115
  %v117 = vadd.f32 %v116, 0.0
  %v118 = vld [vmem:[%s2] sm:$0xff]
  %v119 = vadd.f32 %v118, %v113
  %120 = vst [vmem:[%s2] sm:$0xff] %v119
  %v121 = vld [vmem:[%s3] sm:$0xff]
  %v122 = vadd.f32 %v121, %v117
  %123 = vst [vmem:[%s3] sm:$0xff] %v122
  // Predicated region
  $region14: #{custom_dice_loss.1} parent=0 // pred_check
    _
  $region15: #{custom_dice_loss.1} parent=0 // pred_check_branch
    %125 = sbr.rel (0) target = $region17
  $region16: #{custom_dice_loss.1} parent=0 // pred_region
    _
  $region17: #{custom_dice_loss.1} parent=0 // pred_fallthru
    _
  // Predicated region
  $region18: #{custom_dice_loss.1} parent=0 // pred_check
    _
  $region19: #{custom_dice_loss.1} parent=0 // pred_check_branch
    %127 = sbr.rel (0) target = $region21
  $region20: #{custom_dice_loss.1} parent=0 // pred_region
    _
  $region21: #{custom_dice_loss.1} parent=0 // pred_fallthru
    _
  // Predicated region
  $region22: #{custom_dice_loss.1} parent=0 // pred_check
    _
  $region23: #{custom_dice_loss.1} parent=0 // pred_check_branch
    %129 = sbr.rel (0) target = $region25
  $region24: #{custom_dice_loss.1} parent=0 // pred_region
    _
  $region25: #{custom_dice_loss.1} parent=0 // pred_fallthru
    _
  // Predicated region
  $region26: #{custom_dice_loss.1} parent=0 // pred_check
    _
  $region27: #{custom_dice_loss.1} parent=0 // pred_check_branch
    %131 = sbr.rel (0) target = $region29
  $region28: #{custom_dice_loss.1} parent=0 // pred_region
    _
  $region29: #{custom_dice_loss.1} parent=0 // pred_fallthru
    _

</llo_original>
